<compile_context>
chip_gen: v7x
topology: tpu7x:2x2x1
jax: 0.10.0
libtpu: 0.0.40
codegen_flags: <defaults>
</compile_context>

<pallas_src>
import jax
import jax.numpy as jnp
from jax.experimental import pallas as pl
from jax.experimental.pallas import tpu as pltpu


# ----------------------------------------------------------------------------
# Hardware-aware sizing helpers
# ----------------------------------------------------------------------------

def _block_budget():
    """(target logits-block bytes, physical VMEM bytes) for this generation."""
    vmem_phys = 128 << 20
    try:
        info = pltpu.get_tpu_info()
        v = getattr(info, "vmem_capacity_bytes", None)
        if v:
            vmem_phys = int(v)
    except Exception:
        pass
    target = (2 << 20) if vmem_phys <= (64 << 20) else (4 << 20)
    return target, vmem_phys


def _sublane_multiple(itemsize):
    if itemsize >= 4:
        return 8
    if itemsize == 2:
        return 16
    return 32


def _pick_tile(extent, target, multiple, cap):
    """Largest tile <= min(cap, extent); multiple of `multiple` (or == extent
    when extent <= multiple, i.e. the full dim)."""
    extent = int(extent)
    if extent <= multiple:
        return extent
    t = max(multiple, min(int(target), int(cap), extent))
    return int((t // multiple) * multiple)


def _vmem_limit_bytes(block_elems, itemsize, aux_pad_bytes, n_aux, vmem_phys):
    """Scoped-VMEM budget: 2x double-buffered logits blocks + ~4x f32
    intermediates + tile-padded target/weight buffers + headroom."""
    preds_bytes = block_elems * itemsize
    f32_bytes = block_elems * 4
    budget = 2 * preds_bytes + 4 * f32_bytes + 2 * n_aux * aux_pad_bytes + (6 << 20)
    cap = (vmem_phys * 7) // 16            # stay well below physical VMEM
    return int(min(max(budget, 24 << 20), cap))


# ----------------------------------------------------------------------------
# Kernels
# ----------------------------------------------------------------------------

def _make_rows_c_kernel(row_tile, rows, has_weights):
    """2D path: logits block (row_tile, C), classes on lanes."""

    def kernel(*refs):
        if has_weights:
            preds_ref, tgt_ref, w_ref, out_ref = refs
        else:
            preds_ref, tgt_ref, out_ref = refs
            w_ref = None

        logits = preds_ref[...].astype(jnp.float32)            # (T, C)
        tgt = tgt_ref[...]                                      # (T, 1) int32

        # Ragged-tail mask (rows is a static Python int baked into the kernel).
        row0 = pl.program_id(0) * row_tile
        row_ids = row0 + jax.lax.broadcasted_iota(jnp.int32, (row_tile, 1), 0)
        valid = row_ids < rows

        # Numerically stable log-softmax + select-based target-logit gather.
        m = jnp.max(logits, axis=1, keepdims=True)
        shifted = logits - m
        sumexp = jnp.sum(jnp.exp(shifted), axis=1, keepdims=True)
        cls = jax.lax.broadcasted_iota(jnp.int32, logits.shape, 1)
        tgt_shift = jnp.sum(jnp.where(cls == tgt, shifted, 0.0),
                            axis=1, keepdims=True)
        nll = jnp.log(sumexp) - tgt_shift                       # (T, 1)
        if has_weights:
            nll = nll * w_ref[...]
        # where(valid, ...) also scrubs any NaN/Inf coming from out-of-bounds
        # (ragged-tail) garbage rows before the reduction.
        part = jnp.sum(jnp.where(valid, nll, 0.0))
        out_ref[...] = jnp.broadcast_to(part, out_ref.shape)

    return kernel


def _make_nchw_kernel(hw_tile, hw, has_weights):
    """4D path: logits block (1, C, hw_tile); classes on sublanes, pixels on
    lanes. All per-pixel math is lane-dense."""

    def kernel(*refs):
        if has_weights:
            preds_ref, tgt_ref, w_ref, out_ref = refs
        else:
            preds_ref, tgt_ref, out_ref = refs
            w_ref = None

        logits = preds_ref[...].astype(jnp.float32)             # (1, C, T)
        tgt = tgt_ref[...]                                       # (1, 1, T)

        p0 = pl.program_id(1) * hw_tile
        pix_ids = p0 + jax.lax.broadcasted_iota(jnp.int32, (1, 1, hw_tile), 2)
        valid = pix_ids < hw

        m = jnp.max(logits, axis=1, keepdims=True)               # (1, 1, T)
        shifted = logits - m
        sumexp = jnp.sum(jnp.exp(shifted), axis=1, keepdims=True)
        cls = jax.lax.broadcasted_iota(jnp.int32, logits.shape, 1)
        tgt_shift = jnp.sum(jnp.where(cls == tgt, shifted, 0.0),
                            axis=1, keepdims=True)
        nll = jnp.log(sumexp) - tgt_shift                        # (1, 1, T)
        if has_weights:
            nll = nll * w_ref[...]
        part = jnp.sum(jnp.where(valid, nll, 0.0))
        out_ref[...] = jnp.broadcast_to(part, out_ref.shape)

    return kernel


# ----------------------------------------------------------------------------
# Wrapper
# ----------------------------------------------------------------------------

def softmax_cross_entropy_loss(preds, target, class_weights=None):
    """JAX/Pallas equivalent of SoftmaxCrossEntropyLoss.forward."""
    preds = jnp.asarray(preds)
    target = jnp.asarray(target)
    has_w = class_weights is not None
    w_classes = jnp.asarray(class_weights, jnp.float32) if has_w else None

    itemsize = jnp.dtype(preds.dtype).itemsize
    target_block_bytes, vmem_phys = _block_budget()

    if preds.ndim == 2:
        rows, c = preds.shape
        tgt2 = target.reshape(rows, 1).astype(jnp.int32)

        row_tile = _pick_tile(rows,
                              max(1, target_block_bytes // max(c * itemsize, 1)),
                              _sublane_multiple(itemsize), cap=1024)
        n_tiles = pl.cdiv(rows, row_tile)
        grid = (n_tiles,)
        num_cells = n_tiles

        in_specs = [pl.BlockSpec((row_tile, c), lambda i: (i, 0)),
                    pl.BlockSpec((row_tile, 1), lambda i: (i, 0))]
        args = [preds, tgt2]
        if has_w:
            w_rows = jnp.take(w_classes,
                              target.reshape(-1).astype(jnp.int32)).reshape(rows, 1)
            in_specs.append(pl.BlockSpec((row_tile, 1), lambda i: (i, 0)))
            args.append(w_rows)
            denom = jnp.sum(w_rows)
        else:
            denom = jnp.float32(rows)

        out_specs = pl.BlockSpec((1, 1, 128), lambda i: (i, 0, 0))
        kernel = _make_rows_c_kernel(row_tile, rows, has_w)
        dim_sem = ("parallel",)
        block_elems = row_tile * c
        aux_pad_bytes = row_tile * 128 * 4      # (row_tile,1) blocks lane-pad to 128

    elif preds.ndim == 4:
        n, c, h, w = preds.shape
        hw = h * w
        preds3 = preds.reshape(n, c, hw)                     # free reshape (NCHW native)
        tgt3 = target.reshape(n, 1, hw).astype(jnp.int32)

        hw_tile = _pick_tile(hw,
                             max(128, target_block_bytes // max(c * itemsize, 1)),
                             128, cap=8192)
        n_hw = pl.cdiv(hw, hw_tile)
        grid = (n, n_hw)
        num_cells = n * n_hw

        in_specs = [pl.BlockSpec((1, c, hw_tile), lambda ni, ti: (ni, 0, ti)),
                    pl.BlockSpec((1, 1, hw_tile), lambda ni, ti: (ni, 0, ti))]
        args = [preds3, tgt3]
        if has_w:
            w_rows = jnp.take(w_classes,
                              target.reshape(-1).astype(jnp.int32)).reshape(n, 1, hw)
            in_specs.append(pl.BlockSpec((1, 1, hw_tile), lambda ni, ti: (ni, 0, ti)))
            args.append(w_rows)
            denom = jnp.sum(w_rows)
        else:
            denom = jnp.float32(n * hw)

        out_specs = pl.BlockSpec((1, 1, 128), lambda ni, ti: (ni * n_hw + ti, 0, 0))
        kernel = _make_nchw_kernel(hw_tile, hw, has_w)
        dim_sem = ("parallel", "parallel")
        block_elems = c * hw_tile
        aux_pad_bytes = 8 * hw_tile * 4         # (1,1,hw_tile) blocks sublane-pad to 8

    else:
        raise ValueError("preds must be [N, C] or [N, C, H, W]")

    vmem_limit = _vmem_limit_bytes(block_elems, itemsize, aux_pad_bytes,
                                   2 if has_w else 1, vmem_phys)

    partials = pl.pallas_call(
        kernel,
        out_shape=jax.ShapeDtypeStruct((num_cells, 1, 128), jnp.float32),
        grid_spec=pltpu.PrefetchScalarGridSpec(
            num_scalar_prefetch=0,
            grid=grid,
            in_specs=in_specs,
            out_specs=out_specs,
        ),
        compiler_params=pltpu.CompilerParams(
            dimension_semantics=dim_sem,
            vmem_limit_bytes=vmem_limit,
        ),
    )(*args)

    # Tiny final reduction + (possibly 0/0, matching torch) divide in plain JAX.
    return jnp.sum(partials[:, 0, 0]) / denom


# ----------------------------------------------------------------------------
# Pure-JAX reference (torch.nn.CrossEntropyLoss, reduction='mean')
# ----------------------------------------------------------------------------

def _reference(preds, target, class_weights=None):
    if preds.ndim == 4:
        _, c, _, _ = preds.shape
        preds = jnp.transpose(preds, (0, 2, 3, 1)).reshape(-1, c)
        target = target.reshape(-1)
    logp = jax.nn.log_softmax(preds.astype(jnp.float32), axis=-1)
    nll = -jnp.take_along_axis(logp, target[:, None].astype(jnp.int32), axis=-1)[:, 0]
    if class_weights is None:
        return jnp.mean(nll)
    w = jnp.asarray(class_weights, jnp.float32)[target]
    return jnp.sum(nll * w) / jnp.sum(w)


if __name__ == "__main__":
    key = jax.random.PRNGKey(0)
    k1, k2, k3, k4, k5, k6 = jax.random.split(key, 6)

    # Case 1: preds [batch, num_classes], small C (no HBM relayout, C on lanes).
    B, C = 8, 32
    preds_2d = jax.random.normal(k1, (B, C), dtype=jnp.float32)
    tgt_1d = jax.random.randint(k2, (B,), 0, C)

    # Case 2: segmentation-style [N, C, H, W], C=4 streamed in native NCHW layout.
    N, C4, H, W = 2, 4, 16, 16
    preds_4d = jax.random.normal(k3, (N, C4, H, W), dtype=jnp.float32)
    tgt_3d = jax.random.randint(k4, (N, H, W), 0, C4)
    class_weights4 = jnp.linspace(0.5, 1.5, C4)

    # Case 3: wide-C bf16 logits, classes on lanes, bf16 streamed natively.
    B3, C3 = 16, 256
    preds_wide = jax.random.normal(k5, (B3, C3), dtype=jnp.float32).astype(jnp.bfloat16)
    tgt_wide = jax.random.randint(k6, (B3,), 0, C3)
    class_weights3 = jnp.linspace(0.25, 2.0, C3)

    cases = [
        (preds_2d, tgt_1d, None, 1e-5),
        (preds_4d, tgt_3d, None, 1e-5),
        (preds_4d, tgt_3d, class_weights4, 1e-5),
        (preds_wide, tgt_wide, None, 1e-4),
        (preds_wide, tgt_wide, class_weights3, 1e-4),
    ]
    for p, t, wgt, tol in cases:
        out = softmax_cross_entropy_loss(p, t, class_weights=wgt)
        jax.block_until_ready(out)
        ref = _reference(p, t, class_weights=wgt)
        assert jnp.allclose(out, ref, rtol=tol, atol=tol), (out, ref)

    print("KERNEL_OK")
</pallas_src>

<mosaic_0001>
module attributes {stable_mosaic.version = 11 : i64} {
  func.func @kernel(%arg0: i32, %arg1: memref<8x32xf32, #tpu.memory_space<vmem>>, %arg2: memref<8x1xi32, #tpu.memory_space<vmem>>, %arg3: memref<1x1x128xf32, #tpu.memory_space<vmem>>) attributes {dimension_semantics = [#tpu.dimension_semantics<parallel>], iteration_bounds = array<i64: 1>, scalar_prefetch = 0 : i64, scratch_operands = 0 : i64, tpu.core_type = #tpu.core_type<tc>, window_params = [{transform_indices = @transform_0, window_bounds = array<i64: 8, 32>}, {transform_indices = @transform_1, window_bounds = array<i64: 8, 1>}, {transform_indices = @transform_2, window_bounds = array<i64: 1, 1, 128>}]} {
    %c0 = arith.constant 0 : index
    %c0_0 = arith.constant 0 : index
    %0 = vector.load %arg1[%c0, %c0_0] : memref<8x32xf32, #tpu.memory_space<vmem>>, vector<8x32xf32>
    %c0_1 = arith.constant 0 : index
    %c0_2 = arith.constant 0 : index
    %1 = vector.load %arg2[%c0_1, %c0_2] : memref<8x1xi32, #tpu.memory_space<vmem>>, vector<8x1xi32>
    %c8_i32 = arith.constant 8 : i32
    %2 = arith.muli %arg0, %c8_i32 : i32
    %3 = tpu.iota {dimensions = array<i32: 0>} : vector<8x1xi32>
    %4 = vector.broadcast %2 : i32 to vector<8x1xi32>
    %5 = arith.addi %4, %3 : vector<8x1xi32>
    %c8_i32_3 = arith.constant 8 : i32
    %6 = vector.broadcast %c8_i32_3 : i32 to vector<8x1xi32>
    %7 = arith.cmpi slt, %5, %6 : vector<8x1xi32>
    %cst = arith.constant dense<0xFF800000> : vector<8xf32>
    %8 = vector.multi_reduction <maximumf>, %0, %cst [1] : vector<8x32xf32> to vector<8xf32>
    %9 = vector.shape_cast %8 : vector<8xf32> to vector<8x1xf32>
    %10 = vector.broadcast %9 : vector<8x1xf32> to vector<8x32xf32>
    %11 = arith.subf %0, %10 : vector<8x32xf32>
    %12 = math.exp %11 : vector<8x32xf32>
    %cst_4 = arith.constant dense<0.000000e+00> : vector<8xf32>
    %13 = vector.multi_reduction <add>, %12, %cst_4 [1] : vector<8x32xf32> to vector<8xf32>
    %14 = vector.shape_cast %13 : vector<8xf32> to vector<8x1xf32>
    %15 = tpu.iota {dimensions = array<i32: 1>} : vector<8x32xi32>
    %16 = vector.broadcast %1 : vector<8x1xi32> to vector<8x32xi32>
    %17 = arith.cmpi eq, %15, %16 : vector<8x32xi32>
    %cst_5 = arith.constant 0.000000e+00 : f32
    %18 = vector.broadcast %cst_5 : f32 to vector<8x32xf32>
    %19 = arith.select %17, %11, %18 : vector<8x32xi1>, vector<8x32xf32>
    %cst_6 = arith.constant dense<0.000000e+00> : vector<8xf32>
    %20 = vector.multi_reduction <add>, %19, %cst_6 [1] : vector<8x32xf32> to vector<8xf32>
    %21 = vector.shape_cast %20 : vector<8xf32> to vector<8x1xf32>
    %22 = math.log %14 : vector<8x1xf32>
    %23 = arith.subf %22, %21 : vector<8x1xf32>
    %cst_7 = arith.constant 0.000000e+00 : f32
    %24 = vector.broadcast %cst_7 : f32 to vector<8x1xf32>
    %25 = arith.select %7, %23, %24 : vector<8x1xi1>, vector<8x1xf32>
    %26 = vector.shape_cast %25 : vector<8x1xf32> to vector<1x8x1xf32>
    %cst_8 = arith.constant dense<0.000000e+00> : vector<1xf32>
    %27 = vector.multi_reduction <add>, %26, %cst_8 [1, 2] : vector<1x8x1xf32> to vector<1xf32>
    %28 = vector.shape_cast %27 : vector<1xf32> to vector<1x1x1xf32>
    %29 = vector.extract %28[0, 0, 0] : f32 from vector<1x1x1xf32>
    %30 = vector.broadcast %29 : f32 to vector<1x1x128xf32>
    %c0_9 = arith.constant 0 : index
    %c0_10 = arith.constant 0 : index
    %c0_11 = arith.constant 0 : index
    %31 = vector.load %arg3[%c0_9, %c0_10, %c0_11] : memref<1x1x128xf32, #tpu.memory_space<vmem>>, vector<1x1x128xf32>
    tpu.vector_store %arg3[%c0_9, %c0_10, %c0_11], %30 {strides = array<i32>} : memref<1x1x128xf32, #tpu.memory_space<vmem>>, vector<1x1x128xf32>,
    return
  }
  func.func @transform_0(%arg0: i32) -> (i32, i32) {
    %c0_i32 = arith.constant 0 : i32
    %c0_i32_0 = arith.constant 0 : i32
    return %arg0, %c0_i32 : i32, i32
  }
  func.func @transform_1(%arg0: i32) -> (i32, i32) {
    %c0_i32 = arith.constant 0 : i32
    %c0_i32_0 = arith.constant 0 : i32
    return %arg0, %c0_i32 : i32, i32
  }
  func.func @transform_2(%arg0: i32) -> (i32, i32, i32) {
    %c0_i32 = arith.constant 0 : i32
    %c0_i32_0 = arith.constant 0 : i32
    %c0_i32_1 = arith.constant 0 : i32
    return %arg0, %c0_i32, %c0_i32_0 : i32, i32, i32
  }
}

</mosaic_0001>

<llo_original>
// kernel: tpu_custom_call.1
$region0: #{tpu_custom_call.1}
  #allocation0 [shape = 'u32[]', space=smem, size = 0x4, offset = 0x4, fixed_abs, tag = 'smem constant byte address 0x4 - core index']
  #allocation1 [shape = 'u32[144,128]{1,0:T(1,128)}', space=vmem, size = 0x12000, scoped, tag = 'internal scratch']
  %s0 = inlined_call_operand.vmem [shape: f32[8,32], index: 0, kind: input, shape index: {}]
  %s1 = inlined_call_operand.vmem [shape: s32[8,1], index: 1, kind: input, shape index: {}]
  %s2 = inlined_call_operand.hbm [shape: f32[1,1,128], index: 2, kind: output, shape index: {}]
  %s3 = sld [smem:[#allocation0]]
  $region18: #{tpu_custom_call.1} parent=0
    _
  %s5 = ssub.s32 1, %s3
  %s6 = scalar_select 0, %s5, %s3
  $region1: #{tpu_custom_call.1} parent=0
    #allocation2 [shape = 'u8[512]{0}', space=vmem, size = 0x400, scoped, tag = 'output window, operand 0, single buffered']
    #allocation3 [shape = 's32[1]{0}', space=sflag, size = 0x4, scoped, tag = 'scoped memory for tpu_custom_call.1']
    %7 = vsyncpa [#allocation3], 0
    // Predicated region
    $region2: #{tpu_custom_call.1} parent=1 // pred_check
      _
    $region3: #{tpu_custom_call.1} parent=1 // pred_check_branch
      %9 = sbr.rel (0) target = $region5
    $region4: #{tpu_custom_call.1} parent=1 // pred_region
      _
    $region5: #{tpu_custom_call.1} parent=1 // pred_fallthru
      _
    // Predicated region
    $region6: #{tpu_custom_call.1} parent=1 // pred_check
      _
    $region7: #{tpu_custom_call.1} parent=1 // pred_check_branch
      %11 = sbr.rel (0) target = $region9
    $region8: #{tpu_custom_call.1} parent=1 // pred_region
      _
    $region9: #{tpu_custom_call.1} parent=1 // pred_fallthru
      _
    %v12 = vld [vmem:[%s0] sm:$0xff]
    %v13 = vld [vmem:[%s1] sm:$0xff]
    %s14 = smul.u32 0, 8
    %v15 = vlaneseq
    %v16 = vshrl.u32 %v15, 7
    %v17 = vstv %s14
    %v18 = vadd.s32 %v17, %v16
    %vm19 = vcmp.lt.s32.totalorder %v18, 8
    %vm20 = vcmask 261120
    %v21 = vsel %vm20, %v12, -inf
    %22 = vmax.xlane.f32.xlu0 %v21
    %v23 = vpop.xlane.xlu0 %22
    %v24 = vsub.f32 %v12, %v23
    %v25 = vmul.f32 %v24, 1.442695
    %v26 = vpow.pop %v25
    %v27 = vsel %vm20, %v26, 0.0
    %28 = vadd.xlane.f32.xlu0 %v27
    %v29 = vpop.xlane.xlu0 %28
    %v30 = vlaneseq
    %v31 = vand.u32 %v30, 127
    %32 = vset.pattern.permute.xlu0 0
    %33 = vperm.xlu0 %32, %v13
    %v34 = vpop.permute.xlu0 %33
    %vm35 = vcmp.eq.s32.totalorder %v31, %v34
    %v36 = vsel %vm35, %v24, 0.0
    %v37 = vsel %vm20, %v36, 0.0
    %38 = vadd.xlane.f32.xlu0 %v37
    %v39 = vpop.xlane.xlu0 %38
    %v40 = vlog2.pop %v29
    %v41 = vmul.f32 %v40, 0.6931472
    %v42 = vsub.f32 %v41, %v39
    %v43 = vsel %vm19, %v42, 0.0
    %vm44 = vcmask 7168
    %v45 = vsel %vm44, %v43, 0.0
    %46 = vadd.xlane.f32.xlu0 %v45
    %v47 = vpop.xlane.xlu0 %46
    %v48 = vrot.slane %v47, 4
    %v49 = vadd.f32 %v47, %v48
    %v50 = vrot.slane %v49, 2
    %v51 = vadd.f32 %v49, %v50
    %v52 = vrot.slane %v51, 1
    %v53 = vadd.f32 %v51, %v52
    %s54 = vtos %v53
    %v55 = vstv %s54
    %56 = vst [vmem:[#allocation2] sm:$0x1] %v55
    // Predicated region
    $region10: #{tpu_custom_call.1} parent=1 // pred_check
      _
    $region11: #{tpu_custom_call.1} parent=1 // pred_check_branch
      %58 = sbr.rel (0) target = $region13
    $region12: #{tpu_custom_call.1} parent=1 // pred_region
      %s60 = ssub.s32 16, 16
      %61 = vsyncadd [#allocation3], %s60
      %s63 = sshll.u32 [#allocation2], 4
      %s64 = int_to_ptr.vmem [resolvable:$true] %s63
      %66 = dma.vmem_to_hbm [thread:$0]  %s64, 16, %s2, [#allocation3]
    $region13: #{tpu_custom_call.1} parent=1 // pred_fallthru
      _
    // Predicated region
    $region14: #{tpu_custom_call.1} parent=1 // pred_check
      _
    $region15: #{tpu_custom_call.1} parent=1 // pred_check_branch
      %68 = sbr.rel (0) target = $region17
    $region16: #{tpu_custom_call.1} parent=1 // pred_region
      %69 = dma.done [#allocation3], 16
    $region17: #{tpu_custom_call.1} parent=1 // pred_fallthru
      _
    %70 = vsyncpa [#allocation3], 1

</llo_original>
